<compile_context>
chip_gen: v7x
topology: tpu7x:2x2x1
jax: 0.10.0
libtpu: 0.0.40
codegen_flags: <defaults>
</compile_context>

<pallas_src>
import functools

import jax
import jax.numpy as jnp
from jax.experimental import pallas as pl
from jax.experimental.pallas import tpu as pltpu


def _round_up(x, m):
    return -(-x // m) * m


def _smodule_kernel(w_ref, gemb_ref, word_ref, out_ref, *, G, L, Dg, Dw):
    """One token-tile of SModule.forward.

    w_ref    : (G, Tt, L)       f32  precomputed weights (masked, /csum, *4)
    gemb_ref : (G, Tt, L*Dg)    f32  gaz embeddings, layer-major lanes, T on sublanes
    word_ref : (Tt, Dw)         f32  word embeddings
    out_ref  : (Tt, Dw + L*Dg)  f32  fused output row [word_emb | structure_aug]
    """
    LDg = L * Dg
    tile_t = gemb_ref.shape[1]

    # Constant lane-expansion matrix: expand[l, l*Dg + d] = 1.  Built from 2-D
    # broadcasted_iota + compares (all plain VPU ops); rows >= L are zero over
    # the logical column range by construction, so padded-K contributions of
    # the tiny matmul below cannot contaminate the result.
    row = jax.lax.broadcasted_iota(jnp.int32, (L, LDg), 0)
    col = jax.lax.broadcasted_iota(jnp.int32, (L, LDg), 1)
    expand = jnp.logical_and(col >= row * Dg, col < (row + 1) * Dg)
    expand = expand.astype(jnp.float32)

    # Weighted reduction over the gaz axis.  T sits on sublanes, so every step
    # is a full-slab VPU FMA over (Tt, L*Dg) -- no cross-sublane (XLU) reduce,
    # no lane slicing, no concat.  The (Tt, L) -> (Tt, L*Dg) weight expansion
    # rides the otherwise-idle MXU.
    acc = jnp.zeros((tile_t, LDg), jnp.float32)
    for g in range(G):                                   # static, G is small
        w_exp = jnp.dot(w_ref[g], expand, preferred_element_type=jnp.float32)
        acc = acc + w_exp * gemb_ref[g]

    # Fused output row: word_emb passthrough + structure-augmentation half.
    out_ref[:, :Dw] = word_ref[...]
    out_ref[:, Dw:] = acc


def _pick_tile_t(T, per_token_block_bytes, *, budget_bytes=16 << 20,
                 max_tile=1024, min_grid_steps=2):
    """Largest multiple-of-8 token tile whose double-buffered blocks fit budget.

    16 MiB of (double-buffered) blocks plus a few MiB of in-kernel temporaries
    stays comfortably under the explicit 32 MiB vmem_limit_bytes requested
    below, which is legal on every generation (v5e/v6e physical 128 MiB, v7x
    physical 64 MiB; it also raises v5e's 16 MiB default scoped limit).
    For longer sequences the tile is capped so the grid has >= min_grid_steps
    steps, letting v7x shard the "parallel" axis across its two TensorCores.
    """
    tile = int(budget_bytes // (2 * per_token_block_bytes))
    tile = min(tile, max_tile)
    if T >= 128:
        tile = min(tile, _round_up(pl.cdiv(T, min_grid_steps), 8))
    tile = max(8, (tile // 8) * 8)
    if tile >= T:
        return T
    return tile


def smodule_forward(word_emb, gaz_embeds, gaz_count, gaz_mask, *, tile_t=None):
    """word_emb (T,Dw); gaz_embeds (T,L,G,Dg); gaz_count/gaz_mask (T,L,G)."""
    T, L, G, Dg = gaz_embeds.shape
    LDg = L * Dg
    Dw = word_emb.shape[-1]
    Dout = Dw + LDg

    gaz_count = gaz_count.astype(jnp.float32)

    # Precompute the scalar weight math in XLA (fuses with the gather output):
    #   weights = count / count_sum * 4, zeroed where mask > 0.
    # Zeroing the weight is equivalent to the reference's masked_fill of the
    # embeddings, since only the product is summed.
    # NOTE: a token whose total gaz_count is 0 divides by zero here, exactly
    # like the PyTorch module (no clamp added, to preserve semantics).
    count_sum = jnp.sum(gaz_count, axis=(1, 2), keepdims=True)          # (T,1,1)
    w = gaz_count / count_sum * 4.0
    w = jnp.where(gaz_mask > 0, 0.0, w)                                 # (T,L,G)

    # Kernel-friendly layouts: reduced gaz axis leading, token axis on
    # sublanes, layer*emb flat on lanes.  Cheap XLA transposes fused with the
    # embedding gather.
    w_k = jnp.transpose(w, (2, 0, 1))                                   # (G,T,L)
    ge_k = jnp.transpose(gaz_embeds.astype(jnp.float32),
                         (2, 0, 1, 3)).reshape(G, T, LDg)               # (G,T,L*Dg)
    word = word_emb.astype(jnp.float32)                                 # (T,Dw)

    # Padded f32 VMEM bytes per token for all blocks (lanes pad to 128).
    per_token_bytes = 4 * (G * _round_up(LDg, 128)      # gaz embeddings
                           + G * _round_up(L, 128)      # weights
                           + _round_up(Dw, 128)         # word embeddings
                           + _round_up(Dout, 128))      # fused output row
    if tile_t is None:
        tile_t = _pick_tile_t(T, per_token_bytes)

    grid = (pl.cdiv(T, tile_t),)
    return pl.pallas_call(
        functools.partial(_smodule_kernel, G=G, L=L, Dg=Dg, Dw=Dw),
        out_shape=jax.ShapeDtypeStruct((T, Dout), jnp.float32),
        grid_spec=pltpu.PrefetchScalarGridSpec(
            num_scalar_prefetch=0,
            grid=grid,
            in_specs=[
                pl.BlockSpec((G, tile_t, L), lambda i: (0, i, 0)),
                pl.BlockSpec((G, tile_t, LDg), lambda i: (0, i, 0)),
                pl.BlockSpec((tile_t, Dw), lambda i: (i, 0)),
            ],
            out_specs=pl.BlockSpec((tile_t, Dout), lambda i: (i, 0)),
        ),
        compiler_params=pltpu.CompilerParams(
            dimension_semantics=("parallel",),
            vmem_limit_bytes=32 << 20),
    )(w_k, ge_k, word)


def smodule_apply(word_table, gaz_table, word_ids, layer_gaz_ids, gaz_count,
                  gaz_mask):
    """Glue: embedding gathers (XLA) + Pallas hot path (weighted mix + concat)."""
    # TODO(synk): fuse the gaz-table gather into the kernel (one-hot MXU matmul
    # for small vocabularies, or scalar-prefetched ids + manual DMA row gather
    # for large ones) to avoid materializing the (T, 4, G, Dg) gather in HBM.
    word_emb = jnp.take(word_table, word_ids, axis=0)                   # (T, Dw)
    gaz_embeds = jnp.take(gaz_table, layer_gaz_ids, axis=0)             # (T,4,G,Dg)
    return smodule_forward(word_emb, gaz_embeds, gaz_count, gaz_mask)


def _reference(word_table, gaz_table, word_ids, layer_gaz_ids, gaz_count,
               gaz_mask):
    # Pure-JAX reference mirroring the PyTorch forward.
    word_emb = word_table[word_ids]                                     # (T, Dw)
    gaz_embeds = gaz_table[layer_gaz_ids]                               # (T,4,G,Dg)
    gaz_embeds = jnp.where(gaz_mask[..., None] > 0, 0.0, gaz_embeds)
    count_sum = jnp.sum(gaz_count, axis=(1, 2), keepdims=True)          # (T,1,1)
    weights = gaz_count / count_sum * 4.0
    aug = jnp.sum(weights[..., None] * gaz_embeds, axis=2)              # (T,4,Dg)
    aug = aug.reshape(word_emb.shape[0], -1)
    return jnp.concatenate([word_emb, aug], axis=-1)


if __name__ == "__main__":
    # Small, deterministic setup consistent with the module.
    T = 8            # word_seq_len
    L = 4            # number of gaz layers (fixed to 4 in the module)
    G = 5            # gaz_num
    Dw = 32          # word_emb_dim
    Dg = 16          # gaz_alphabet_emb_dim
    word_vocab = 50
    gaz_vocab = 40

    key = jax.random.PRNGKey(0)
    k1, k2, k3, k4, k5, k6 = jax.random.split(key, 6)

    # Deterministic synthetic "embedding tables" (stand-ins for checkpoints).
    word_table = jax.random.normal(k1, (word_vocab, Dw), dtype=jnp.float32)
    gaz_table = jax.random.normal(k2, (gaz_vocab, Dg), dtype=jnp.float32)

    # Instance inputs.
    word_ids = jax.random.randint(k3, (T,), 0, word_vocab, dtype=jnp.int32)
    layer_gaz_ids = jax.random.randint(k4, (T, L, G), 0, gaz_vocab,
                                       dtype=jnp.int32)
    gaz_count = jax.random.uniform(k5, (T, L, G), minval=0.5, maxval=3.0,
                                   dtype=jnp.float32)
    gaz_mask = jax.random.bernoulli(k6, 0.3, (T, L, G)).astype(jnp.float32)

    out = smodule_apply(word_table, gaz_table, word_ids, layer_gaz_ids,
                        gaz_count, gaz_mask)
    out = jax.block_until_ready(out)

    ref = _reference(word_table, gaz_table, word_ids, layer_gaz_ids,
                     gaz_count, gaz_mask)
    assert out.shape == (T, Dw + L * Dg), out.shape
    assert jnp.allclose(out, ref, atol=1e-5, rtol=1e-5), "mismatch vs reference"

    print("KERNEL_OK")
</pallas_src>

<mosaic_0001>
module attributes {stable_mosaic.version = 11 : i64} {
  func.func @_smodule_kernel(%arg0: i32, %arg1: memref<5x8x4xf32, #tpu.memory_space<vmem>>, %arg2: memref<5x8x64xf32, #tpu.memory_space<vmem>>, %arg3: memref<8x32xf32, #tpu.memory_space<vmem>>, %arg4: memref<8x96xf32, #tpu.memory_space<vmem>>) attributes {dimension_semantics = [#tpu.dimension_semantics<parallel>], iteration_bounds = array<i64: 1>, scalar_prefetch = 0 : i64, scratch_operands = 0 : i64, tpu.core_type = #tpu.core_type<tc>, window_params = [{transform_indices = @transform_0, window_bounds = array<i64: 5, 8, 4>}, {transform_indices = @transform_1, window_bounds = array<i64: 5, 8, 64>}, {transform_indices = @transform_2, window_bounds = array<i64: 8, 32>}, {transform_indices = @transform_3, window_bounds = array<i64: 8, 96>}]} {
    %0 = tpu.iota {dimensions = array<i32: 0>} : vector<4x64xi32>
    %1 = tpu.iota {dimensions = array<i32: 1>} : vector<4x64xi32>
    %c16_i32 = arith.constant 16 : i32
    %2 = vector.broadcast %c16_i32 : i32 to vector<4x64xi32>
    %3 = arith.muli %0, %2 : vector<4x64xi32>
    %4 = arith.cmpi sge, %1, %3 : vector<4x64xi32>
    %c1_i32 = arith.constant 1 : i32
    %5 = vector.broadcast %c1_i32 : i32 to vector<4x64xi32>
    %6 = arith.addi %0, %5 : vector<4x64xi32>
    %c16_i32_0 = arith.constant 16 : i32
    %7 = vector.broadcast %c16_i32_0 : i32 to vector<4x64xi32>
    %8 = arith.muli %6, %7 : vector<4x64xi32>
    %9 = arith.cmpi slt, %1, %8 : vector<4x64xi32>
    %10 = arith.andi %4, %9 : vector<4x64xi1>
    %11 = arith.extui %10 : vector<4x64xi1> to vector<4x64xi32>
    %12 = arith.sitofp %11 : vector<4x64xi32> to vector<4x64xf32>
    %cst = arith.constant 0.000000e+00 : f32
    %13 = vector.broadcast %cst : f32 to vector<8x64xf32>
    %c0 = arith.constant 0 : index
    %c0_1 = arith.constant 0 : index
    %c0_2 = arith.constant 0 : index
    %14 = vector.load %arg1[%c0, %c0_1, %c0_2] : memref<5x8x4xf32, #tpu.memory_space<vmem>>, vector<1x8x4xf32>
    %15 = vector.shape_cast %14 : vector<1x8x4xf32> to vector<8x4xf32>
    %cst_3 = arith.constant dense<0.000000e+00> : vector<8x64xf32>
    %16 = tpu.matmul %15, %12, %cst_3 {dimension_numbers = #tpu.dot_dimension_numbers<[1], [0], [0], [1], [0, 0, 1, 1], [], []>} : vector<8x4xf32>, vector<4x64xf32>, vector<8x64xf32> -> vector<8x64xf32>
    %c0_4 = arith.constant 0 : index
    %c0_5 = arith.constant 0 : index
    %c0_6 = arith.constant 0 : index
    %17 = vector.load %arg2[%c0_4, %c0_5, %c0_6] : memref<5x8x64xf32, #tpu.memory_space<vmem>>, vector<1x8x64xf32>
    %18 = vector.shape_cast %17 : vector<1x8x64xf32> to vector<8x64xf32>
    %19 = arith.mulf %16, %18 : vector<8x64xf32>
    %20 = arith.addf %13, %19 : vector<8x64xf32>
    %c1 = arith.constant 1 : index
    %c0_7 = arith.constant 0 : index
    %c0_8 = arith.constant 0 : index
    %21 = vector.load %arg1[%c1, %c0_7, %c0_8] : memref<5x8x4xf32, #tpu.memory_space<vmem>>, vector<1x8x4xf32>
    %22 = vector.shape_cast %21 : vector<1x8x4xf32> to vector<8x4xf32>
    %cst_9 = arith.constant dense<0.000000e+00> : vector<8x64xf32>
    %23 = tpu.matmul %22, %12, %cst_9 {dimension_numbers = #tpu.dot_dimension_numbers<[1], [0], [0], [1], [0, 0, 1, 1], [], []>} : vector<8x4xf32>, vector<4x64xf32>, vector<8x64xf32> -> vector<8x64xf32>
    %c1_10 = arith.constant 1 : index
    %c0_11 = arith.constant 0 : index
    %c0_12 = arith.constant 0 : index
    %24 = vector.load %arg2[%c1_10, %c0_11, %c0_12] : memref<5x8x64xf32, #tpu.memory_space<vmem>>, vector<1x8x64xf32>
    %25 = vector.shape_cast %24 : vector<1x8x64xf32> to vector<8x64xf32>
    %26 = arith.mulf %23, %25 : vector<8x64xf32>
    %27 = arith.addf %20, %26 : vector<8x64xf32>
    %c2 = arith.constant 2 : index
    %c0_13 = arith.constant 0 : index
    %c0_14 = arith.constant 0 : index
    %28 = vector.load %arg1[%c2, %c0_13, %c0_14] : memref<5x8x4xf32, #tpu.memory_space<vmem>>, vector<1x8x4xf32>
    %29 = vector.shape_cast %28 : vector<1x8x4xf32> to vector<8x4xf32>
    %cst_15 = arith.constant dense<0.000000e+00> : vector<8x64xf32>
    %30 = tpu.matmul %29, %12, %cst_15 {dimension_numbers = #tpu.dot_dimension_numbers<[1], [0], [0], [1], [0, 0, 1, 1], [], []>} : vector<8x4xf32>, vector<4x64xf32>, vector<8x64xf32> -> vector<8x64xf32>
    %c2_16 = arith.constant 2 : index
    %c0_17 = arith.constant 0 : index
    %c0_18 = arith.constant 0 : index
    %31 = vector.load %arg2[%c2_16, %c0_17, %c0_18] : memref<5x8x64xf32, #tpu.memory_space<vmem>>, vector<1x8x64xf32>
    %32 = vector.shape_cast %31 : vector<1x8x64xf32> to vector<8x64xf32>
    %33 = arith.mulf %30, %32 : vector<8x64xf32>
    %34 = arith.addf %27, %33 : vector<8x64xf32>
    %c3 = arith.constant 3 : index
    %c0_19 = arith.constant 0 : index
    %c0_20 = arith.constant 0 : index
    %35 = vector.load %arg1[%c3, %c0_19, %c0_20] : memref<5x8x4xf32, #tpu.memory_space<vmem>>, vector<1x8x4xf32>
    %36 = vector.shape_cast %35 : vector<1x8x4xf32> to vector<8x4xf32>
    %cst_21 = arith.constant dense<0.000000e+00> : vector<8x64xf32>
    %37 = tpu.matmul %36, %12, %cst_21 {dimension_numbers = #tpu.dot_dimension_numbers<[1], [0], [0], [1], [0, 0, 1, 1], [], []>} : vector<8x4xf32>, vector<4x64xf32>, vector<8x64xf32> -> vector<8x64xf32>
    %c3_22 = arith.constant 3 : index
    %c0_23 = arith.constant 0 : index
    %c0_24 = arith.constant 0 : index
    %38 = vector.load %arg2[%c3_22, %c0_23, %c0_24] : memref<5x8x64xf32, #tpu.memory_space<vmem>>, vector<1x8x64xf32>
    %39 = vector.shape_cast %38 : vector<1x8x64xf32> to vector<8x64xf32>
    %40 = arith.mulf %37, %39 : vector<8x64xf32>
    %41 = arith.addf %34, %40 : vector<8x64xf32>
    %c4 = arith.constant 4 : index
    %c0_25 = arith.constant 0 : index
    %c0_26 = arith.constant 0 : index
    %42 = vector.load %arg1[%c4, %c0_25, %c0_26] : memref<5x8x4xf32, #tpu.memory_space<vmem>>, vector<1x8x4xf32>
    %43 = vector.shape_cast %42 : vector<1x8x4xf32> to vector<8x4xf32>
    %cst_27 = arith.constant dense<0.000000e+00> : vector<8x64xf32>
    %44 = tpu.matmul %43, %12, %cst_27 {dimension_numbers = #tpu.dot_dimension_numbers<[1], [0], [0], [1], [0, 0, 1, 1], [], []>} : vector<8x4xf32>, vector<4x64xf32>, vector<8x64xf32> -> vector<8x64xf32>
    %c4_28 = arith.constant 4 : index
    %c0_29 = arith.constant 0 : index
    %c0_30 = arith.constant 0 : index
    %45 = vector.load %arg2[%c4_28, %c0_29, %c0_30] : memref<5x8x64xf32, #tpu.memory_space<vmem>>, vector<1x8x64xf32>
    %46 = vector.shape_cast %45 : vector<1x8x64xf32> to vector<8x64xf32>
    %47 = arith.mulf %44, %46 : vector<8x64xf32>
    %48 = arith.addf %41, %47 : vector<8x64xf32>
    %c0_31 = arith.constant 0 : index
    %c0_32 = arith.constant 0 : index
    %49 = vector.load %arg3[%c0_31, %c0_32] : memref<8x32xf32, #tpu.memory_space<vmem>>, vector<8x32xf32>
    %c0_33 = arith.constant 0 : index
    %c0_34 = arith.constant 0 : index
    %50 = vector.load %arg4[%c0_33, %c0_34] : memref<8x96xf32, #tpu.memory_space<vmem>>, vector<8x32xf32>
    tpu.vector_store %arg4[%c0_33, %c0_34], %49 {strides = array<i32>} : memref<8x96xf32, #tpu.memory_space<vmem>>, vector<8x32xf32>,
    %c0_35 = arith.constant 0 : index
    %c32 = arith.constant 32 : index
    %51 = vector.load %arg4[%c0_35, %c32] : memref<8x96xf32, #tpu.memory_space<vmem>>, vector<8x64xf32>
    tpu.vector_store %arg4[%c0_35, %c32], %48 {strides = array<i32>} : memref<8x96xf32, #tpu.memory_space<vmem>>, vector<8x64xf32>,
    return
  }
  func.func @transform_0(%arg0: i32) -> (i32, i32, i32) {
    %c0_i32 = arith.constant 0 : i32
    %c0_i32_0 = arith.constant 0 : i32
    %c0_i32_1 = arith.constant 0 : i32
    return %c0_i32, %arg0, %c0_i32_0 : i32, i32, i32
  }
  func.func @transform_1(%arg0: i32) -> (i32, i32, i32) {
    %c0_i32 = arith.constant 0 : i32
    %c0_i32_0 = arith.constant 0 : i32
    %c0_i32_1 = arith.constant 0 : i32
    return %c0_i32, %arg0, %c0_i32_0 : i32, i32, i32
  }
  func.func @transform_2(%arg0: i32) -> (i32, i32) {
    %c0_i32 = arith.constant 0 : i32
    %c0_i32_0 = arith.constant 0 : i32
    return %arg0, %c0_i32 : i32, i32
  }
  func.func @transform_3(%arg0: i32) -> (i32, i32) {
    %c0_i32 = arith.constant 0 : i32
    %c0_i32_0 = arith.constant 0 : i32
    return %arg0, %c0_i32 : i32, i32
  }
}

</mosaic_0001>

<llo_original>
// kernel: tpu_custom_call.1
$region0: #{tpu_custom_call.1}
  #allocation0 [shape = 'u32[]', space=smem, size = 0x4, offset = 0x4, fixed_abs, tag = 'smem constant byte address 0x4 - core index']
  #allocation1 [shape = 'u32[144,128]{1,0:T(1,128)}', space=vmem, size = 0x12000, scoped, tag = 'internal scratch']
  %s0 = inlined_call_operand.vmem [shape: f32[5,8,4], index: 0, kind: input, shape index: {}]
  %s1 = inlined_call_operand.vmem [shape: f32[5,8,64], index: 1, kind: input, shape index: {}]
  %s2 = inlined_call_operand.vmem [shape: f32[8,32], index: 2, kind: input, shape index: {}]
  %s3 = inlined_call_operand.hbm [shape: f32[8,96], index: 3, kind: output, shape index: {}]
  %s4 = sld [smem:[#allocation0]]
  $region22: #{tpu_custom_call.1} parent=0
    _
  %s6 = ssub.s32 1, %s4
  %s7 = scalar_select 0, %s6, %s4
  $region1: #{tpu_custom_call.1} parent=0
    #allocation2 [shape = 'u8[4096]{0}', space=vmem, size = 0x1000, scoped, tag = 'output window, operand 0, single buffered']
    #allocation3 [shape = 's32[1]{0}', space=sflag, size = 0x4, scoped, tag = 'scoped memory for tpu_custom_call.1']
    %8 = vsyncpa [#allocation3], 0
    // Predicated region
    $region2: #{tpu_custom_call.1} parent=1 // pred_check
      _
    $region3: #{tpu_custom_call.1} parent=1 // pred_check_branch
      %10 = sbr.rel (0) target = $region5
    $region4: #{tpu_custom_call.1} parent=1 // pred_region
      _
    $region5: #{tpu_custom_call.1} parent=1 // pred_fallthru
      _
    // Predicated region
    $region6: #{tpu_custom_call.1} parent=1 // pred_check
      _
    $region7: #{tpu_custom_call.1} parent=1 // pred_check_branch
      %12 = sbr.rel (0) target = $region9
    $region8: #{tpu_custom_call.1} parent=1 // pred_region
      _
    $region9: #{tpu_custom_call.1} parent=1 // pred_fallthru
      _
    // Predicated region
    $region10: #{tpu_custom_call.1} parent=1 // pred_check
      _
    $region11: #{tpu_custom_call.1} parent=1 // pred_check_branch
      %14 = sbr.rel (0) target = $region13
    $region12: #{tpu_custom_call.1} parent=1 // pred_region
      _
    $region13: #{tpu_custom_call.1} parent=1 // pred_fallthru
      _
    %v15 = vlaneseq
    %v16 = vshrl.u32 %v15, 7
    %v17 = vlaneseq
    %v18 = vand.u32 %v17, 127
    %v19 = vmul.u32 %v16, 16
    %vm20 = vcmp.ge.s32.totalorder %v18, %v19
    %v21 = vadd.s32 %v16, 1
    %v22 = vmul.u32 %v21, 16
    %vm23 = vcmp.lt.s32.totalorder %v18, %v22
    %vm24 = vmand %vm20, %vm23
    %v25 = vsel %vm24, 1, 0
    %v26 = vcvt.s32.f32 %v25
    %v27 = vld [vmem:[%s0] sm:$0xff]
    %vm28 = vcmask 31744
    %v30 = vsel %vm28, %v27, 0
    %vm32 = vcmask 1043456
    %v34 = vsel %vm32, %v26, 0
    %36 = vmatprep.subr.mxu0 0.0
    %37 = vmatpush1.msra.mxu0 %v34
    %38 = vmatprep.subr.mxu0 0.0
    %39 = vmatpush1.msra.mxu0 0.0
    %40 = vmatprep.subr.mxu0 0.0
    %41 = vmatpush1.msra.mxu0 0.0
    %42 = vmatprep.subr.mxu0 0.0
    %43 = vmatpush1.msra.mxu0 0.0
    %44 = vmatprep.subr.mxu0 0.0
    %45 = vmatpush1.msra.mxu0 0.0
    %46 = vmatprep.subr.mxu0 0.0
    %47 = vmatpush1.msra.mxu0 0.0
    %48 = vmatprep.subr.mxu0 0.0
    %49 = vmatpush1.msra.mxu0 0.0
    %50 = vmatprep.subr.mxu0 0.0
    %51 = vmatpush1.msra.mxu0 0.0
    %52 = vmatprep.subr.mxu0 0.0
    %53 = vmatpush1.msra.mxu0 0.0
    %54 = vmatprep.subr.mxu0 0.0
    %55 = vmatpush1.msra.mxu0 0.0
    %56 = vmatprep.subr.mxu0 0.0
    %57 = vmatpush1.msra.mxu0 0.0
    %58 = vmatprep.subr.mxu0 0.0
    %59 = vmatpush1.msra.mxu0 0.0
    %60 = vmatprep.subr.mxu0 0.0
    %61 = vmatpush1.msra.mxu0 0.0
    %62 = vmatprep.subr.mxu0 0.0
    %63 = vmatpush1.msra.mxu0 0.0
    %64 = vmatprep.subr.mxu0 0.0
    %65 = vmatpush1.msra.mxu0 0.0
    %66 = vmatprep.subr.mxu0 0.0
    %67 = vmatpush1.msra.mxu0 0.0
    %68 = vmatprep.subr.mxu0 0.0
    %69 = vmatpush1.msra.mxu0 0.0
    %70 = vmatprep.subr.mxu0 0.0
    %71 = vmatpush1.msra.mxu0 0.0
    %72 = vmatprep.subr.mxu0 0.0
    %73 = vmatpush1.msra.mxu0 0.0
    %74 = vmatprep.subr.mxu0 0.0
    %75 = vmatpush1.msra.mxu0 0.0
    %76 = vmatprep.subr.mxu0 0.0
    %77 = vmatpush1.msra.mxu0 0.0
    %78 = vmatprep.subr.mxu0 0.0
    %79 = vmatpush1.msra.mxu0 0.0
    %80 = vmatprep.subr.mxu0 0.0
    %81 = vmatpush1.msra.mxu0 0.0
    %82 = vmatprep.subr.mxu0 0.0
    %83 = vmatpush1.msra.mxu0 0.0
    %84 = vmatprep.subr.mxu0 0.0
    %85 = vmatpush1.msra.mxu0 0.0
    %86 = vmatprep.subr.mxu0 0.0
    %87 = vmatpush1.msra.mxu0 0.0
    %88 = vmatprep.subr.mxu0 0.0
    %89 = vmatpush1.msra.mxu0 0.0
    %90 = vmatprep.subr.mxu0 0.0
    %91 = vmatpush1.msra.mxu0 0.0
    %92 = vmatprep.subr.mxu0 0.0
    %93 = vmatpush1.msra.mxu0 0.0
    %94 = vmatprep.subr.mxu0 0.0
    %95 = vmatpush1.msra.mxu0 0.0
    %96 = vmatprep.subr.mxu0 0.0
    %97 = vmatpush1.msra.mxu0 0.0
    %98 = vmatprep.subr.mxu0 0.0
    %99 = vmatpush1.msra.mxu0 0.0
    %100 = vmatprep.mubr.f32.mxu0 0.0
    %101 = vmatmul.mubr.f32.gmra.mrb[0].mxu0 %v30
    %v102 = vpop.f32.mrb[0].mxu0
    %v103 = vadd.f32 0.0, %v102
    %v104 = vpop.f32.mrb[0].mxu0
    %105 = vdwg.mxu0
    %v106 = vld [vmem:[%s1] sm:$0xff]
    %v107 = vmul.f32 %v103, %v106
    %v108 = vadd.f32 %v107, 0.0
    %s109 = scalar_lea.vmem %s0, 8
    %v110 = vld [vmem:[%s109] sm:$0xff]
    %v112 = vsel %vm28, %v110, 0
    %114 = vmatprep.subr.mxu0 0.0
    %115 = vmatpush1.msra.mxu0 %v34
    %116 = vmatprep.subr.mxu0 0.0
    %117 = vmatpush1.msra.mxu0 0.0
    %118 = vmatprep.subr.mxu0 0.0
    %119 = vmatpush1.msra.mxu0 0.0
    %120 = vmatprep.subr.mxu0 0.0
    %121 = vmatpush1.msra.mxu0 0.0
    %122 = vmatprep.subr.mxu0 0.0
    %123 = vmatpush1.msra.mxu0 0.0
    %124 = vmatprep.subr.mxu0 0.0
    %125 = vmatpush1.msra.mxu0 0.0
    %126 = vmatprep.subr.mxu0 0.0
    %127 = vmatpush1.msra.mxu0 0.0
    %128 = vmatprep.subr.mxu0 0.0
    %129 = vmatpush1.msra.mxu0 0.0
    %130 = vmatprep.subr.mxu0 0.0
    %131 = vmatpush1.msra.mxu0 0.0
    %132 = vmatprep.subr.mxu0 0.0
    %133 = vmatpush1.msra.mxu0 0.0
    %134 = vmatprep.subr.mxu0 0.0
    %135 = vmatpush1.msra.mxu0 0.0
    %136 = vmatprep.subr.mxu0 0.0
    %137 = vmatpush1.msra.mxu0 0.0
    %138 = vmatprep.subr.mxu0 0.0
    %139 = vmatpush1.msra.mxu0 0.0
    %140 = vmatprep.subr.mxu0 0.0
    %141 = vmatpush1.msra.mxu0 0.0
    %142 = vmatprep.subr.mxu0 0.0
    %143 = vmatpush1.msra.mxu0 0.0
    %144 = vmatprep.subr.mxu0 0.0
    %145 = vmatpush1.msra.mxu0 0.0
    %146 = vmatprep.subr.mxu0 0.0
    %147 = vmatpush1.msra.mxu0 0.0
    %148 = vmatprep.subr.mxu0 0.0
    %149 = vmatpush1.msra.mxu0 0.0
    %150 = vmatprep.subr.mxu0 0.0
    %151 = vmatpush1.msra.mxu0 0.0
    %152 = vmatprep.subr.mxu0 0.0
    %153 = vmatpush1.msra.mxu0 0.0
    %154 = vmatprep.subr.mxu0 0.0
    %155 = vmatpush1.msra.mxu0 0.0
    %156 = vmatprep.subr.mxu0 0.0
    %157 = vmatpush1.msra.mxu0 0.0
    %158 = vmatprep.subr.mxu0 0.0
    %159 = vmatpush1.msra.mxu0 0.0
    %160 = vmatprep.subr.mxu0 0.0
    %161 = vmatpush1.msra.mxu0 0.0
    %162 = vmatprep.subr.mxu0 0.0
    %163 = vmatpush1.msra.mxu0 0.0
    %164 = vmatprep.subr.mxu0 0.0
    %165 = vmatpush1.msra.mxu0 0.0
    %166 = vmatprep.subr.mxu0 0.0
    %167 = vmatpush1.msra.mxu0 0.0
    %168 = vmatprep.subr.mxu0 0.0
    %169 = vmatpush1.msra.mxu0 0.0
    %170 = vmatprep.subr.mxu0 0.0
    %171 = vmatpush1.msra.mxu0 0.0
    %172 = vmatprep.subr.mxu0 0.0
    %173 = vmatpush1.msra.mxu0 0.0
    %174 = vmatprep.subr.mxu0 0.0
    %175 = vmatpush1.msra.mxu0 0.0
    %176 = vmatprep.subr.mxu0 0.0
    %177 = vmatpush1.msra.mxu0 0.0
    %178 = vmatprep.mubr.f32.mxu0 0.0
    %179 = vmatmul.mubr.f32.gmra.mrb[0].mxu0 %v112
    %v180 = vpop.f32.mrb[0].mxu0
    %v181 = vadd.f32 0.0, %v180
    %v182 = vpop.f32.mrb[0].mxu0
    %183 = vdwg.mxu0
    %s184 = scalar_lea.vmem %s1, 8
    %v185 = vld [vmem:[%s184] sm:$0xff]
    %v186 = vmul.f32 %v181, %v185
    %v187 = vadd.f32 %v108, %v186
    %s188 = scalar_lea.vmem %s0, 16
    %v189 = vld [vmem:[%s188] sm:$0xff]
    %v191 = vsel %vm28, %v189, 0
    %193 = vmatprep.subr.mxu0 0.0
    %194 = vmatpush1.msra.mxu0 %v34
    %195 = vmatprep.subr.mxu0 0.0
    %196 = vmatpush1.msra.mxu0 0.0
    %197 = vmatprep.subr.mxu0 0.0
    %198 = vmatpush1.msra.mxu0 0.0
    %199 = vmatprep.subr.mxu0 0.0
    %200 = vmatpush1.msra.mxu0 0.0
    %201 = vmatprep.subr.mxu0 0.0
    %202 = vmatpush1.msra.mxu0 0.0
    %203 = vmatprep.subr.mxu0 0.0
    %204 = vmatpush1.msra.mxu0 0.0
    %205 = vmatprep.subr.mxu0 0.0
    %206 = vmatpush1.msra.mxu0 0.0
    %207 = vmatprep.subr.mxu0 0.0
    %208 = vmatpush1.msra.mxu0 0.0
    %209 = vmatprep.subr.mxu0 0.0
    %210 = vmatpush1.msra.mxu0 0.0
    %211 = vmatprep.subr.mxu0 0.0
    %212 = vmatpush1.msra.mxu0 0.0
    %213 = vmatprep.subr.mxu0 0.0
    %214 = vmatpush1.msra.mxu0 0.0
    %215 = vmatprep.subr.mxu0 0.0
    %216 = vmatpush1.msra.mxu0 0.0
    %217 = vmatprep.subr.mxu0 0.0
    %218 = vmatpush1.msra.mxu0 0.0
    %219 = vmatprep.subr.mxu0 0.0
    %220 = vmatpush1.msra.mxu0 0.0
    %221 = vmatprep.subr.mxu0 0.0
    %222 = vmatpush1.msra.mxu0 0.0
    %223 = vmatprep.subr.mxu0 0.0
    %224 = vmatpush1.msra.mxu0 0.0
    %225 = vmatprep.subr.mxu0 0.0
    %226 = vmatpush1.msra.mxu0 0.0
    %227 = vmatprep.subr.mxu0 0.0
    %228 = vmatpush1.msra.mxu0 0.0
    %229 = vmatprep.subr.mxu0 0.0
    %230 = vmatpush1.msra.mxu0 0.0
    %231 = vmatprep.subr.mxu0 0.0
    %232 = vmatpush1.msra.mxu0 0.0
    %233 = vmatprep.subr.mxu0 0.0
    %234 = vmatpush1.msra.mxu0 0.0
    %235 = vmatprep.subr.mxu0 0.0
    %236 = vmatpush1.msra.mxu0 0.0
    %237 = vmatprep.subr.mxu0 0.0
    %238 = vmatpush1.msra.mxu0 0.0
    %239 = vmatprep.subr.mxu0 0.0
    %240 = vmatpush1.msra.mxu0 0.0
    %241 = vmatprep.subr.mxu0 0.0
    %242 = vmatpush1.msra.mxu0 0.0
    %243 = vmatprep.subr.mxu0 0.0
    %244 = vmatpush1.msra.mxu0 0.0
    %245 = vmatprep.subr.mxu0 0.0
    %246 = vmatpush1.msra.mxu0 0.0
    %247 = vmatprep.subr.mxu0 0.0
    %248 = vmatpush1.msra.mxu0 0.0
    %249 = vmatprep.subr.mxu0 0.0
    %250 = vmatpush1.msra.mxu0 0.0
    %251 = vmatprep.subr.mxu0 0.0
    %252 = vmatpush1.msra.mxu0 0.0
    %253 = vmatprep.subr.mxu0 0.0
    %254 = vmatpush1.msra.mxu0 0.0
    %255 = vmatprep.subr.mxu0 0.0
    %256 = vmatpush1.msra.mxu0 0.0
    %257 = vmatprep.mubr.f32.mxu0 0.0
    %258 = vmatmul.mubr.f32.gmra.mrb[0].mxu0 %v191
    %v259 = vpop.f32.mrb[0].mxu0
    %v260 = vadd.f32 0.0, %v259
    %v261 = vpop.f32.mrb[0].mxu0
    %262 = vdwg.mxu0
    %s263 = scalar_lea.vmem %s1, 16
    %v264 = vld [vmem:[%s263] sm:$0xff]
    %v265 = vmul.f32 %v260, %v264
    %v266 = vadd.f32 %v187, %v265
    %s267 = scalar_lea.vmem %s0, 24
    %v268 = vld [vmem:[%s267] sm:$0xff]
    %v270 = vsel %vm28, %v268, 0
    %272 = vmatprep.subr.mxu0 0.0
    %273 = vmatpush1.msra.mxu0 %v34
    %274 = vmatprep.subr.mxu0 0.0
    %275 = vmatpush1.msra.mxu0 0.0
    %276 = vmatprep.subr.mxu0 0.0
    %277 = vmatpush1.msra.mxu0 0.0
    %278 = vmatprep.subr.mxu0 0.0
    %279 = vmatpush1.msra.mxu0 0.0
    %280 = vmatprep.subr.mxu0 0.0
    %281 = vmatpush1.msra.mxu0 0.0
    %282 = vmatprep.subr.mxu0 0.0
    %283 = vmatpush1.msra.mxu0 0.0
    %284 = vmatprep.subr.mxu0 0.0
    %285 = vmatpush1.msra.mxu0 0.0
    %286 = vmatprep.subr.mxu0 0.0
    %287 = vmatpush1.msra.mxu0 0.0
    %288 = vmatprep.subr.mxu0 0.0
    %289 = vmatpush1.msra.mxu0 0.0
    %290 = vmatprep.subr.mxu0 0.0
    %291 = vmatpush1.msra.mxu0 0.0
    %292 = vmatprep.subr.mxu0 0.0
    %293 = vmatpush1.msra.mxu0 0.0
    %294 = vmatprep.subr.mxu0 0.0
    %295 = vmatpush1.msra.mxu0 0.0
    %296 = vmatprep.subr.mxu0 0.0
    %297 = vmatpush1.msra.mxu0 0.0
    %298 = vmatprep.subr.mxu0 0.0
    %299 = vmatpush1.msra.mxu0 0.0
    %300 = vmatprep.subr.mxu0 0.0
    %301 = vmatpush1.msra.mxu0 0.0
    %302 = vmatprep.subr.mxu0 0.0
    %303 = vmatpush1.msra.mxu0 0.0
    %304 = vmatprep.subr.mxu0 0.0
    %305 = vmatpush1.msra.mxu0 0.0
    %306 = vmatprep.subr.mxu0 0.0
    %307 = vmatpush1.msra.mxu0 0.0
    %308 = vmatprep.subr.mxu0 0.0
    %309 = vmatpush1.msra.mxu0 0.0
    %310 = vmatprep.subr.mxu0 0.0
    %311 = vmatpush1.msra.mxu0 0.0
    %312 = vmatprep.subr.mxu0 0.0
    %313 = vmatpush1.msra.mxu0 0.0
    %314 = vmatprep.subr.mxu0 0.0
    %315 = vmatpush1.msra.mxu0 0.0
    %316 = vmatprep.subr.mxu0 0.0
    %317 = vmatpush1.msra.mxu0 0.0
    %318 = vmatprep.subr.mxu0 0.0
    %319 = vmatpush1.msra.mxu0 0.0
    %320 = vmatprep.subr.mxu0 0.0
    %321 = vmatpush1.msra.mxu0 0.0
    %322 = vmatprep.subr.mxu0 0.0
    %323 = vmatpush1.msra.mxu0 0.0
    %324 = vmatprep.subr.mxu0 0.0
    %325 = vmatpush1.msra.mxu0 0.0
    %326 = vmatprep.subr.mxu0 0.0
    %327 = vmatpush1.msra.mxu0 0.0
    %328 = vmatprep.subr.mxu0 0.0
    %329 = vmatpush1.msra.mxu0 0.0
    %330 = vmatprep.subr.mxu0 0.0
    %331 = vmatpush1.msra.mxu0 0.0
    %332 = vmatprep.subr.mxu0 0.0
    %333 = vmatpush1.msra.mxu0 0.0
    %334 = vmatprep.subr.mxu0 0.0
    %335 = vmatpush1.msra.mxu0 0.0
    %336 = vmatprep.mubr.f32.mxu0 0.0
    %337 = vmatmul.mubr.f32.gmra.mrb[0].mxu0 %v270
    %v338 = vpop.f32.mrb[0].mxu0
    %v339 = vadd.f32 0.0, %v338
    %v340 = vpop.f32.mrb[0].mxu0
    %341 = vdwg.mxu0
    %s342 = scalar_lea.vmem %s1, 24
    %v343 = vld [vmem:[%s342] sm:$0xff]
    %v344 = vmul.f32 %v339, %v343
    %v345 = vadd.f32 %v266, %v344
    %s346 = scalar_lea.vmem %s0, 32
    %v347 = vld [vmem:[%s346] sm:$0xff]
    %v349 = vsel %vm28, %v347, 0
    %351 = vmatprep.subr.mxu0 0.0
    %352 = vmatpush1.msra.mxu0 %v34
    %353 = vmatprep.subr.mxu0 0.0
    %354 = vmatpush1.msra.mxu0 0.0
    %355 = vmatprep.subr.mxu0 0.0
    %356 = vmatpush1.msra.mxu0 0.0
    %357 = vmatprep.subr.mxu0 0.0
    %358 = vmatpush1.msra.mxu0 0.0
    %359 = vmatprep.subr.mxu0 0.0
    %360 = vmatpush1.msra.mxu0 0.0
    %361 = vmatprep.subr.mxu0 0.0
    %362 = vmatpush1.msra.mxu0 0.0
    %363 = vmatprep.subr.mxu0 0.0
    %364 = vmatpush1.msra.mxu0 0.0
    %365 = vmatprep.subr.mxu0 0.0
    %366 = vmatpush1.msra.mxu0 0.0
    %367 = vmatprep.subr.mxu0 0.0
    %368 = vmatpush1.msra.mxu0 0.0
    %369 = vmatprep.subr.mxu0 0.0
    %370 = vmatpush1.msra.mxu0 0.0
    %371 = vmatprep.subr.mxu0 0.0
    %372 = vmatpush1.msra.mxu0 0.0
    %373 = vmatprep.subr.mxu0 0.0
    %374 = vmatpush1.msra.mxu0 0.0
    %375 = vmatprep.subr.mxu0 0.0
    %376 = vmatpush1.msra.mxu0 0.0
    %377 = vmatprep.subr.mxu0 0.0
    %378 = vmatpush1.msra.mxu0 0.0
    %379 = vmatprep.subr.mxu0 0.0
    %380 = vmatpush1.msra.mxu0 0.0
    %381 = vmatprep.subr.mxu0 0.0
    %382 = vmatpush1.msra.mxu0 0.0
    %383 = vmatprep.subr.mxu0 0.0
    %384 = vmatpush1.msra.mxu0 0.0
    %385 = vmatprep.subr.mxu0 0.0
    %386 = vmatpush1.msra.mxu0 0.0
    %387 = vmatprep.subr.mxu0 0.0
    %388 = vmatpush1.msra.mxu0 0.0
    %389 = vmatprep.subr.mxu0 0.0
    %390 = vmatpush1.msra.mxu0 0.0
    %391 = vmatprep.subr.mxu0 0.0
    %392 = vmatpush1.msra.mxu0 0.0
    %393 = vmatprep.subr.mxu0 0.0
    %394 = vmatpush1.msra.mxu0 0.0
    %395 = vmatprep.subr.mxu0 0.0
    %396 = vmatpush1.msra.mxu0 0.0
    %397 = vmatprep.subr.mxu0 0.0
    %398 = vmatpush1.msra.mxu0 0.0
    %399 = vmatprep.subr.mxu0 0.0
    %400 = vmatpush1.msra.mxu0 0.0
    %401 = vmatprep.subr.mxu0 0.0
    %402 = vmatpush1.msra.mxu0 0.0
    %403 = vmatprep.subr.mxu0 0.0
    %404 = vmatpush1.msra.mxu0 0.0
    %405 = vmatprep.subr.mxu0 0.0
    %406 = vmatpush1.msra.mxu0 0.0
    %407 = vmatprep.subr.mxu0 0.0
    %408 = vmatpush1.msra.mxu0 0.0
    %409 = vmatprep.subr.mxu0 0.0
    %410 = vmatpush1.msra.mxu0 0.0
    %411 = vmatprep.subr.mxu0 0.0
    %412 = vmatpush1.msra.mxu0 0.0
    %413 = vmatprep.subr.mxu0 0.0
    %414 = vmatpush1.msra.mxu0 0.0
    %415 = vmatprep.mubr.f32.mxu0 0.0
    %416 = vmatmul.mubr.f32.gmra.mrb[0].mxu0 %v349
    %v417 = vpop.f32.mrb[0].mxu0
    %v418 = vadd.f32 0.0, %v417
    %v419 = vpop.f32.mrb[0].mxu0
    %420 = vdwg.mxu0
    %s421 = scalar_lea.vmem %s1, 32
    %v422 = vld [vmem:[%s421] sm:$0xff]
    %v423 = vmul.f32 %v418, %v422
    %v424 = vadd.f32 %v345, %v423
    %v425 = vld [vmem:[%s2] sm:$0xff]
    %vm426 = vcmask 261120
    %427 = vst.msk [vmem:[#allocation2] sm:$0xff] %vm426, %v425
    %429 = vrot.lane.b32.xlu0 %v424, 32
    %v430 = vpop.permute.xlu0 %429
    %vm432 = vcmask 785664
    %433 = vst.msk [vmem:[#allocation2] sm:$0xff] %vm432, %v430
    // Predicated region
    $region14: #{tpu_custom_call.1} parent=1 // pred_check
      _
    $region15: #{tpu_custom_call.1} parent=1 // pred_check_branch
      %435 = sbr.rel (0) target = $region17
    $region16: #{tpu_custom_call.1} parent=1 // pred_region
      %s437 = ssub.s32 128, 128
      %438 = vsyncadd [#allocation3], %s437
      %s440 = sshll.u32 [#allocation2], 4
      %s441 = int_to_ptr.vmem [resolvable:$true] %s440
      %443 = dma.vmem_to_hbm [thread:$0]  %s441, 128, %s3, [#allocation3]
    $region17: #{tpu_custom_call.1} parent=1 // pred_fallthru
      _
    // Predicated region
    $region18: #{tpu_custom_call.1} parent=1 // pred_check
      _
    $region19: #{tpu_custom_call.1} parent=1 // pred_check_branch
      %445 = sbr.rel (0) target = $region21
    $region20: #{tpu_custom_call.1} parent=1 // pred_region
      %446 = dma.done [#allocation3], 128
    $region21: #{tpu_custom_call.1} parent=1 // pred_fallthru
      _
    %447 = vsyncpa [#allocation3], 1

</llo_original>
